<compile_context>
chip_gen: v6e
topology: v6e:2x2x1
jax: 0.10.0
libtpu: 0.0.40
codegen_flags: <defaults>
</compile_context>

<pallas_src>
import functools
import math

import jax
import jax.numpy as jnp
from jax.experimental import pallas as pl
from jax.experimental.pallas import tpu as pltpu


# ---------------------------------------------------------------------------
# Kernel: y = x + pe ; keep = bits >= threshold ; out = keep ? y * scale : 0
# ---------------------------------------------------------------------------
def _pe_dropout_kernel(x_ref, pe_ref, bits_ref, o_ref, *, threshold: int, scale: float):
    # x/bits/out blocks: (1, TR, L); pe block: (TR, L)  (L = 128 lane-dense, or D fallback)
    y = x_ref[0] + pe_ref[...]
    keep = bits_ref[0] >= jnp.int32(threshold)
    o_ref[0] = jnp.where(keep, y * jnp.float32(scale), jnp.float32(0.0)).astype(o_ref.dtype)


# ---------------------------------------------------------------------------
# Parameter setup (same formula as the PyTorch module)
# ---------------------------------------------------------------------------
def make_sinusoidal_pe(max_len: int, d_model: int) -> jnp.ndarray:
    position = jnp.arange(max_len, dtype=jnp.float32)[:, None]            # (max_len, 1)
    div_term = jnp.exp(
        jnp.arange(0, d_model, 2, dtype=jnp.float32) * (-math.log(10000.0) / d_model)
    )                                                                     # (d_model//2,)
    pe = jnp.zeros((max_len, d_model), dtype=jnp.float32)
    pe = pe.at[:, 0::2].set(jnp.sin(position * div_term))
    pe = pe.at[:, 1::2].set(jnp.cos(position * div_term))
    return pe


def _signed_threshold(p: float) -> int:
    # bits are uniform int32 (bitcast of uniform uint32); P(bits < t) = p.
    return int(round(p * (1 << 32))) - (1 << 31)


def _pick_row_tile(n_rows: int, max_rows: int = 2048) -> int:
    """Largest divisor of n_rows that is a multiple of 8 and <= max_rows.

    max_rows=2048 -> 2048*128*4B = 1 MiB f32 per operand block, so the
    double-buffered (x + bits + out) working set stays ~6-8 MiB: well inside
    the scoped-VMEM defaults on v5e (16 MiB), v6e (32 MiB) and v7x (32 MiB).
    """
    if n_rows <= max_rows:
        return n_rows
    for k in range(2, n_rows + 1):
        if n_rows % k == 0:
            tr = n_rows // k
            if tr <= max_rows and tr % 8 == 0:
                return tr
    return n_rows  # no suitable divisor: single full-size (still legal) tile


# ---------------------------------------------------------------------------
# Forward wrapper
# ---------------------------------------------------------------------------
def positional_encoding_forward(
    x: jnp.ndarray,
    pe: jnp.ndarray,
    *,
    p: float = 0.1,
    train: bool = True,
    rng_key=None,
) -> jnp.ndarray:
    """x: (B, S, D) float32; pe: (max_len, D) float32."""
    B, S, D = x.shape
    pe_s = pe[:S, :].astype(x.dtype)

    # Eval / no-dropout path: pure broadcast add, let XLA fuse it.
    if (not train) or p <= 0.0:
        return x + pe_s[None, :, :]

    if rng_key is None:
        rng_key = jax.random.PRNGKey(0)

    # Uniform int32 bits (bitcast of uniform uint32) for the dropout mask;
    # a fresh key per training step gives a fresh mask.
    bits = jax.lax.bitcast_convert_type(
        jax.random.bits(rng_key, x.shape, jnp.uint32), jnp.int32
    )

    threshold = _signed_threshold(p)
    scale = 1.0 / (1.0 - p)
    kernel = functools.partial(_pe_dropout_kernel, threshold=threshold, scale=scale)

    flat = S * D
    if flat % 128 == 0:
        # Lane-dense layout: (B, S, D) -> (B, R, 128) rows of full vregs.
        R = flat // 128
        TR = _pick_row_tile(R)
        NT = R // TR
        x3 = x.reshape(B, R, 128)
        b3 = bits.reshape(B, R, 128)
        pe3 = pe_s.reshape(R, 128)

        out = pl.pallas_call(
            kernel,
            out_shape=jax.ShapeDtypeStruct((B, R, 128), x.dtype),
            grid=(NT, B),  # batch innermost: shared pe tile stays resident across it
            in_specs=[
                pl.BlockSpec((1, TR, 128), lambda t, b: (b, t, 0)),  # x
                pl.BlockSpec((TR, 128), lambda t, b: (t, 0)),        # pe (broadcast over B)
                pl.BlockSpec((1, TR, 128), lambda t, b: (b, t, 0)),  # dropout bits
            ],
            out_specs=pl.BlockSpec((1, TR, 128), lambda t, b: (b, t, 0)),
            compiler_params=pltpu.CompilerParams(
                dimension_semantics=("parallel", "parallel"),
            ),
        )(x3, pe3, b3)
        return out.reshape(B, S, D)

    # Fallback layout (S*D not a multiple of 128): one full (S, D) block per batch.
    return pl.pallas_call(
        kernel,
        out_shape=jax.ShapeDtypeStruct((B, S, D), x.dtype),
        grid=(B,),
        in_specs=[
            pl.BlockSpec((1, S, D), lambda b: (b, 0, 0)),  # x
            pl.BlockSpec((S, D), lambda b: (0, 0)),        # pe
            pl.BlockSpec((1, S, D), lambda b: (b, 0, 0)),  # dropout bits
        ],
        out_specs=pl.BlockSpec((1, S, D), lambda b: (b, 0, 0)),
        compiler_params=pltpu.CompilerParams(dimension_semantics=("parallel",)),
    )(x, pe_s, bits)


if __name__ == "__main__":
    # Small shapes consistent with the module: batch=2, seq=8, d_model=32.
    B, S, D = 2, 8, 32
    MAX_LEN = 64
    P_DROP = 0.1

    root = jax.random.PRNGKey(0)
    kx, kd = jax.random.split(root)
    x = jax.random.normal(kx, (B, S, D), dtype=jnp.float32)
    pe = make_sinusoidal_pe(MAX_LEN, D)
    ref_add = x + pe[:S, :][None, :, :]

    # Eval-mode path (dropout = identity).
    out_eval = jax.block_until_ready(
        positional_encoding_forward(x, pe, p=P_DROP, train=False)
    )
    assert out_eval.shape == (B, S, D) and out_eval.dtype == jnp.float32
    assert jnp.allclose(out_eval, ref_add, atol=1e-6, rtol=1e-6)

    # Training-mode path (Pallas kernel: add + dropout mask + rescale).
    out_train = jax.block_until_ready(
        positional_encoding_forward(x, pe, p=P_DROP, train=True, rng_key=kd)
    )
    assert out_train.shape == (B, S, D) and out_train.dtype == jnp.float32

    # Exact reference: rebuild the same keep mask from the same key/threshold.
    bits_ref = jax.lax.bitcast_convert_type(
        jax.random.bits(kd, (B, S, D), jnp.uint32), jnp.int32
    )
    keep_ref = bits_ref >= jnp.int32(_signed_threshold(P_DROP))
    ref_train = jnp.where(keep_ref, ref_add * jnp.float32(1.0 / (1.0 - P_DROP)), 0.0)
    assert jnp.allclose(out_train, ref_train, atol=1e-5, rtol=1e-5)
    # Sanity: drop rate in a plausible range around p.
    drop_frac = float(jnp.mean((out_train == 0.0).astype(jnp.float32)))
    assert 0.0 <= drop_frac <= 0.5

    print("KERNEL_OK")
</pallas_src>

<mosaic_0001>
module attributes {stable_mosaic.version = 11 : i64} {
  func.func @_pe_dropout_kernel(%arg0: i32, %arg1: i32, %arg2: memref<1x2x128xf32, #tpu.memory_space<vmem>>, %arg3: memref<2x128xf32, #tpu.memory_space<vmem>>, %arg4: memref<1x2x128xi32, #tpu.memory_space<vmem>>, %arg5: memref<1x2x128xf32, #tpu.memory_space<vmem>>) attributes {dimension_semantics = [#tpu.dimension_semantics<parallel>, #tpu.dimension_semantics<parallel>], iteration_bounds = array<i64: 1, 2>, scalar_prefetch = 0 : i64, scratch_operands = 0 : i64, tpu.core_type = #tpu.core_type<tc>, window_params = [{transform_indices = @transform_0, window_bounds = array<i64: 1, 2, 128>}, {transform_indices = @transform_1, window_bounds = array<i64: 2, 128>}, {transform_indices = @transform_2, window_bounds = array<i64: 1, 2, 128>}, {transform_indices = @transform_3, window_bounds = array<i64: 1, 2, 128>}]} {
    %c0 = arith.constant 0 : index
    %c0_0 = arith.constant 0 : index
    %c0_1 = arith.constant 0 : index
    %0 = vector.load %arg2[%c0, %c0_0, %c0_1] : memref<1x2x128xf32, #tpu.memory_space<vmem>>, vector<1x2x128xf32>
    %1 = vector.shape_cast %0 : vector<1x2x128xf32> to vector<2x128xf32>
    %c0_2 = arith.constant 0 : index
    %c0_3 = arith.constant 0 : index
    %2 = vector.load %arg3[%c0_2, %c0_3] : memref<2x128xf32, #tpu.memory_space<vmem>>, vector<2x128xf32>
    %3 = arith.addf %1, %2 : vector<2x128xf32>
    %c0_4 = arith.constant 0 : index
    %c0_5 = arith.constant 0 : index
    %c0_6 = arith.constant 0 : index
    %4 = vector.load %arg4[%c0_4, %c0_5, %c0_6] : memref<1x2x128xi32, #tpu.memory_space<vmem>>, vector<1x2x128xi32>
    %5 = vector.shape_cast %4 : vector<1x2x128xi32> to vector<2x128xi32>
    %c-1717986918_i32 = arith.constant -1717986918 : i32
    %6 = vector.broadcast %c-1717986918_i32 : i32 to vector<2x128xi32>
    %7 = arith.cmpi sge, %5, %6 : vector<2x128xi32>
    %cst = arith.constant 1.11111116 : f32
    %8 = vector.broadcast %cst : f32 to vector<2x128xf32>
    %9 = arith.mulf %3, %8 : vector<2x128xf32>
    %cst_7 = arith.constant 0.000000e+00 : f32
    %10 = vector.broadcast %cst_7 : f32 to vector<2x128xf32>
    %11 = arith.select %7, %9, %10 : vector<2x128xi1>, vector<2x128xf32>
    %c0_8 = arith.constant 0 : index
    %c0_9 = arith.constant 0 : index
    %c0_10 = arith.constant 0 : index
    %12 = vector.load %arg5[%c0_8, %c0_9, %c0_10] : memref<1x2x128xf32, #tpu.memory_space<vmem>>, vector<1x2x128xf32>
    %13 = vector.shape_cast %12 : vector<1x2x128xf32> to vector<2x128xf32>
    %14 = vector.shape_cast %11 : vector<2x128xf32> to vector<1x2x128xf32>
    tpu.vector_store %arg5[%c0_8, %c0_9, %c0_10], %14 {strides = array<i32>} : memref<1x2x128xf32, #tpu.memory_space<vmem>>, vector<1x2x128xf32>,
    return
  }
  func.func @transform_0(%arg0: i32, %arg1: i32) -> (i32, i32, i32) {
    %c0_i32 = arith.constant 0 : i32
    %c0_i32_0 = arith.constant 0 : i32
    return %arg1, %arg0, %c0_i32 : i32, i32, i32
  }
  func.func @transform_1(%arg0: i32, %arg1: i32) -> (i32, i32) {
    %c0_i32 = arith.constant 0 : i32
    %c0_i32_0 = arith.constant 0 : i32
    return %arg0, %c0_i32 : i32, i32
  }
  func.func @transform_2(%arg0: i32, %arg1: i32) -> (i32, i32, i32) {
    %c0_i32 = arith.constant 0 : i32
    %c0_i32_0 = arith.constant 0 : i32
    return %arg1, %arg0, %c0_i32 : i32, i32, i32
  }
  func.func @transform_3(%arg0: i32, %arg1: i32) -> (i32, i32, i32) {
    %c0_i32 = arith.constant 0 : i32
    %c0_i32_0 = arith.constant 0 : i32
    return %arg1, %arg0, %c0_i32 : i32, i32, i32
  }
}

</mosaic_0001>

<llo_original>
// kernel: tpu_custom_call.1
$region0: #{tpu_custom_call.1}
  #allocation0 [shape = 'u32[]', space=smem, size = 0x4, offset = 0x4, fixed_abs, tag = 'smem constant byte address 0x4 - core index']
  #allocation1 [shape = 'u32[144,128]{1,0:T(1,128)}', space=vmem, size = 0x12000, scoped, tag = 'internal scratch']
  %s0 = inlined_call_operand.hbm [shape: f32[2,2,128], index: 0, kind: input, shape index: {}]
  %s1 = inlined_call_operand.hbm [shape: f32[2,128], index: 1, kind: input, shape index: {}]
  %s2 = inlined_call_operand.hbm [shape: s32[2,2,128], index: 2, kind: input, shape index: {}]
  %s3 = inlined_call_operand.hbm [shape: f32[2,2,128], index: 3, kind: output, shape index: {}]
  %s4 = sld [smem:[#allocation0]]
  $region57: #{tpu_custom_call.1} parent=0
    _
  %s6 = ssub.s32 1, %s4
  %s7 = scalar_select 0, %s6, %s4
  $region1: #{tpu_custom_call.1} parent=0
    #allocation2 [shape = 'u8[2048]{0}', space=vmem, size = 0x800, scoped, tag = 'input window, operand 0']
    #allocation3 [shape = 's32[2]{0}', space=sflag, size = 0x8, scoped, tag = 'scoped memory for tpu_custom_call.1']
    #allocation4 [shape = 's32[2]{0}', space=sflag, size = 0x8, scoped, tag = 'scoped memory for tpu_custom_call.1']
    #allocation5 [shape = 'u8[1024]{0}', space=vmem, size = 0x400, scoped, tag = 'input window, operand 1, single buffered']
    #allocation6 [shape = 's32[1]{0}', space=sflag, size = 0x4, scoped, tag = 'scoped memory for tpu_custom_call.1']
    #allocation7 [shape = 'u8[2048]{0}', space=vmem, size = 0x800, scoped, tag = 'input window, operand 2']
    #allocation8 [shape = 'u8[2048]{0}', space=vmem, size = 0x800, scoped, tag = 'output window, operand 0']
    %8 = vsyncpa [#allocation3], 0
    %s9 = scalar_lea.sflag [#allocation3], 1
    %10 = vsyncpa %s9, 0
    %11 = vsyncpa [#allocation6], 0
    %12 = vsyncpa [#allocation4], 0
    %s13 = scalar_lea.sflag [#allocation4], 1
    %14 = vsyncpa %s13, 0
    loop: start=0, step=1, limit=4
    $region2: #{tpu_custom_call.1} parent=1 // loop_pre_header
      _
    $region3: #{tpu_custom_call.1} parent=1 // loop_header
      %s16 = sphi 0, %s20
      %p17 = scmp.ge.s32.totalorder %s16, 4
      %s23 = sphi 0, %s35
      %s24 = sphi 0, %s31
      %s25 = sphi 0, %s23
      %s26 = sphi 0, %s24
      %s27 = sphi 0, %s25
      %s28 = sphi 0, %s26
      %s40 = sphi 0, %s42
      %s43 = sphi 0, %s40
      %s44 = sphi 0, %s43
      %s60 = sphi 0, %s44
      %s66 = sphi 0, %s68
      %s69 = sphi 0, %s66
      %s70 = sphi 0, %s69
      %s86 = sphi 0, %s70
      %s94 = sphi 0, %s96
      %s97 = sphi 0, %s94
      %s98 = sphi 0, %s97
      %s114 = sphi 0, %s98
      %s122 = sphi 0, %s124
      %s125 = sphi 0, %s122
      %s126 = sphi 0, %s125
      %s142 = sphi 0, %s126
    $region4: #{tpu_custom_call.1} parent=1 // loop_header_branch
      %19 = sbr.rel (%p17) target = $region8
    $region5: #{tpu_custom_call.1} parent=1 // loop_body
      %s21 = ssub.s32 %s16, 1
      %s22 = ssub.s32 %s16, 2
      %s29 = sadd.s32 1, %s24
      %p30 = scmp.ge.s32.totalorder %s29, 2
      %s31 = scalar_select %p30, 0, %s29
      %s32 = sadd.s32 1, %s23
      %s33 = scalar_select %p30, %s32, %s23
      %p34 = scmp.ge.s32.totalorder %s33, 1
      %s35 = scalar_select %p34, 0, %s33
      %s36 = ssub.s32 %s24, %s31
      %s37 = ssub.s32 %s23, %s35
      %s38 = sor.u32 %s36, %s37
      %p39 = scmp.eq.s32.totalorder %s38, 0
      %s41 = sadd.s32 %s40, 1
      %s42 = scalar_select %p39, %s40, %s41
      %p45 = pneg %p39
      %p46 = scmp.eq.s32.totalorder %s16, 1
      %p47 = por %p45, %p46
      %p48 = scmp.ne.s32.totalorder %s40, %s43
      %p49 = scmp.eq.s32.totalorder %s16, 0
      %p50 = por %p48, %p49
      %p51 = scmp.ne.s32.totalorder %s40, %s43
      %p52 = scmp.eq.s32.totalorder %s21, 1
      %p53 = por %p51, %p52
      %p54 = scmp.ne.s32.totalorder %s43, %s44
      %p55 = scmp.eq.s32.totalorder %s21, 0
      %p56 = por %p54, %p55
      %p57 = scmp.ne.s32.totalorder %s43, %s44
      %p58 = scmp.eq.s32.totalorder %s22, 1
      %p59 = por %p57, %p58
      %p61 = scmp.ne.s32.totalorder %s44, %s60
      %p62 = scmp.eq.s32.totalorder %s22, 0
      %p63 = por %p61, %p62
      %s64 = ssub.s32 %s23, %s35
      %p65 = scmp.eq.s32.totalorder %s64, 0
      %s67 = sadd.s32 %s66, 1
      %s68 = scalar_select %p65, %s66, %s67
      %p71 = pneg %p65
      %p72 = scmp.eq.s32.totalorder %s16, 1
      %p73 = por %p71, %p72
      %p74 = scmp.ne.s32.totalorder %s66, %s69
      %p75 = scmp.eq.s32.totalorder %s16, 0
      %p76 = por %p74, %p75
      %p77 = scmp.ne.s32.totalorder %s66, %s69
      %p78 = scmp.eq.s32.totalorder %s21, 1
      %p79 = por %p77, %p78
      %p80 = scmp.ne.s32.totalorder %s69, %s70
      %p81 = scmp.eq.s32.totalorder %s21, 0
      %p82 = por %p80, %p81
      %p83 = scmp.ne.s32.totalorder %s69, %s70
      %p84 = scmp.eq.s32.totalorder %s22, 1
      %p85 = por %p83, %p84
      %p87 = scmp.ne.s32.totalorder %s70, %s86
      %p88 = scmp.eq.s32.totalorder %s22, 0
      %p89 = por %p87, %p88
      %s90 = ssub.s32 %s24, %s31
      %s91 = ssub.s32 %s23, %s35
      %s92 = sor.u32 %s90, %s91
      %p93 = scmp.eq.s32.totalorder %s92, 0
      %s95 = sadd.s32 %s94, 1
      %s96 = scalar_select %p93, %s94, %s95
      %p99 = pneg %p93
      %p100 = scmp.eq.s32.totalorder %s16, 1
      %p101 = por %p99, %p100
      %p102 = scmp.ne.s32.totalorder %s94, %s97
      %p103 = scmp.eq.s32.totalorder %s16, 0
      %p104 = por %p102, %p103
      %p105 = scmp.ne.s32.totalorder %s94, %s97
      %p106 = scmp.eq.s32.totalorder %s21, 1
      %p107 = por %p105, %p106
      %p108 = scmp.ne.s32.totalorder %s97, %s98
      %p109 = scmp.eq.s32.totalorder %s21, 0
      %p110 = por %p108, %p109
      %p111 = scmp.ne.s32.totalorder %s97, %s98
      %p112 = scmp.eq.s32.totalorder %s22, 1
      %p113 = por %p111, %p112
      %p115 = scmp.ne.s32.totalorder %s98, %s114
      %p116 = scmp.eq.s32.totalorder %s22, 0
      %p117 = por %p115, %p116
      %s118 = ssub.s32 %s24, %s31
      %s119 = ssub.s32 %s23, %s35
      %s120 = sor.u32 %s118, %s119
      %p121 = scmp.eq.s32.totalorder %s120, 0
      %s123 = sadd.s32 %s122, 1
      %s124 = scalar_select %p121, %s122, %s123
      %p127 = pneg %p121
      %p128 = scmp.eq.s32.totalorder %s16, 1
      %p129 = por %p127, %p128
      %p130 = scmp.ne.s32.totalorder %s122, %s125
      %p131 = scmp.eq.s32.totalorder %s16, 0
      %p132 = por %p130, %p131
      %p133 = scmp.ne.s32.totalorder %s122, %s125
      %p134 = scmp.eq.s32.totalorder %s21, 1
      %p135 = por %p133, %p134
      %p136 = scmp.ne.s32.totalorder %s125, %s126
      %p137 = scmp.eq.s32.totalorder %s21, 0
      %p138 = por %p136, %p137
      %p139 = scmp.ne.s32.totalorder %s125, %s126
      %p140 = scmp.eq.s32.totalorder %s22, 1
      %p141 = por %p139, %p140
      %p143 = scmp.ne.s32.totalorder %s126, %s142
      %p144 = scmp.eq.s32.totalorder %s22, 0
      %p145 = por %p143, %p144
      %p146 = scmp.le.s32.totalorder 1, %s16
      %p147 = scmp.lt.s32.totalorder %s16, 3
      %p148 = pnand %p146, %p147
      %p149 = pneg %p148
      // Predicated region
      $region9: #{tpu_custom_call.1} parent=5 // pred_check
        _
      $region10: #{tpu_custom_call.1} parent=5 // pred_check_branch
        %151 = sbr.rel (%p148) target = $region12
      $region11: #{tpu_custom_call.1} parent=5 // pred_region
        %s152 = ssub.s32 %s16, 1
        // Predicated region
        $region13: #{tpu_custom_call.1} parent=11 // pred_check
          %p153 = pneg %p82
        $region14: #{tpu_custom_call.1} parent=11 // pred_check_branch
          %155 = sbr.rel (%p153) target = $region16
        $region15: #{tpu_custom_call.1} parent=11 // pred_region
          %s157 = ssub.s32 32, 32
          %158 = vsyncadd [#allocation6], %s157
          %s159 = smul.addr %s25, 32
          %s160 = scalar_lea.hbm %s1, %s159
          %s162 = sshll.u32 [#allocation5], 4
          %s163 = int_to_ptr.vmem [resolvable:$true] %s162
          %165 = dma.hbm_to_vmem [thread:$0]  %s160, 32, %s163, [#allocation6]
        $region16: #{tpu_custom_call.1} parent=11 // pred_fallthru
          _
      $region12: #{tpu_custom_call.1} parent=5 // pred_fallthru
        _
      %p166 = scmp.lt.s32.totalorder %s16, 2
      // Predicated region
      $region17: #{tpu_custom_call.1} parent=5 // pred_check
        %p167 = pneg %p166
      $region18: #{tpu_custom_call.1} parent=5 // pred_check_branch
        %169 = sbr.rel (%p167) target = $region20
      $region19: #{tpu_custom_call.1} parent=5 // pred_region
        // Predicated region
        $region21: #{tpu_custom_call.1} parent=19 // pred_check
          %p170 = pneg %p50
        $region22: #{tpu_custom_call.1} parent=19 // pred_check_branch
          %172 = sbr.rel (%p170) target = $region24
        $region23: #{tpu_custom_call.1} parent=19 // pred_region
          %s173 = sand.u32 %s16, 1
          %s174 = scalar_lea.sflag [#allocation3], %s173
          %s175 = sand.u32 %s40, 1
          %s176 = smul.addr %s175, 2
          %s177 = scalar_lea.vmem [#allocation2], %s176
          %s179 = ssub.s32 32, 32
          %180 = vsyncadd %s174, %s179
          %s181 = sadd.s32 %s23, %s24
          %s182 = smul.addr %s181, 32
          %s183 = scalar_lea.hbm %s0, %s182
          %s185 = sshll.u32 %s177, 4
          %s186 = int_to_ptr.vmem [resolvable:$true] %s185
          %188 = dma.hbm_to_vmem [thread:$0]  %s183, 32, %s186, %s174
        $region24: #{tpu_custom_call.1} parent=19 // pred_fallthru
          _
        // Predicated region
        $region25: #{tpu_custom_call.1} parent=19 // pred_check
          %p189 = pneg %p104
        $region26: #{tpu_custom_call.1} parent=19 // pred_check_branch
          %191 = sbr.rel (%p189) target = $region28
        $region27: #{tpu_custom_call.1} parent=19 // pred_region
          %s192 = sand.u32 %s16, 1
          %s193 = scalar_lea.sflag [#allocation3], %s192
          %s194 = sand.u32 %s94, 1
          %s195 = smul.addr %s194, 2
          %s196 = scalar_lea.vmem [#allocation7], %s195
          %s198 = ssub.s32 32, 32
          %199 = vsyncadd %s193, %s198
          %s200 = sadd.s32 %s23, %s24
          %s201 = smul.addr %s200, 32
          %s202 = scalar_lea.hbm %s2, %s201
          %s204 = sshll.u32 %s196, 4
          %s205 = int_to_ptr.vmem [resolvable:$true] %s204
          %207 = dma.hbm_to_vmem [thread:$0]  %s202, 32, %s205, %s193
        $region28: #{tpu_custom_call.1} parent=19 // pred_fallthru
          _
      $region20: #{tpu_custom_call.1} parent=5 // pred_fallthru
        _
      %p208 = scmp.le.s32.totalorder 1, %s16
      %p209 = scmp.lt.s32.totalorder %s16, 3
      %p210 = pnand %p208, %p209
      %p211 = pneg %p210
      // Predicated region
      $region29: #{tpu_custom_call.1} parent=5 // pred_check
        _
      $region30: #{tpu_custom_call.1} parent=5 // pred_check_branch
        %213 = sbr.rel (%p210) target = $region32
      $region31: #{tpu_custom_call.1} parent=5 // pred_region
        %s214 = ssub.s32 %s16, 1
        %s215 = sand.u32 %s21, 1
        %s216 = scalar_lea.sflag [#allocation3], %s215
        %s217 = sand.u32 %s43, 1
        %s218 = smul.addr %s217, 2
        %s219 = scalar_lea.vmem [#allocation2], %s218
        // Predicated region
        $region33: #{tpu_custom_call.1} parent=31 // pred_check
          %p220 = pneg %p56
        $region34: #{tpu_custom_call.1} parent=31 // pred_check_branch
          %222 = sbr.rel (%p220) target = $region36
        $region35: #{tpu_custom_call.1} parent=31 // pred_region
          %223 = dma.done %s216, 32
        $region36: #{tpu_custom_call.1} parent=31 // pred_fallthru
          _
        // Predicated region
        $region37: #{tpu_custom_call.1} parent=31 // pred_check
          %p224 = pneg %p82
        $region38: #{tpu_custom_call.1} parent=31 // pred_check_branch
          %226 = sbr.rel (%p224) target = $region40
        $region39: #{tpu_custom_call.1} parent=31 // pred_region
          %227 = dma.done [#allocation6], 32
        $region40: #{tpu_custom_call.1} parent=31 // pred_fallthru
          _
        %s228 = sand.u32 %s21, 1
        %s229 = scalar_lea.sflag [#allocation3], %s228
        %s230 = sand.u32 %s97, 1
        %s231 = smul.addr %s230, 2
        %s232 = scalar_lea.vmem [#allocation7], %s231
        // Predicated region
        $region41: #{tpu_custom_call.1} parent=31 // pred_check
          %p233 = pneg %p110
        $region42: #{tpu_custom_call.1} parent=31 // pred_check_branch
          %235 = sbr.rel (%p233) target = $region44
        $region43: #{tpu_custom_call.1} parent=31 // pred_region
          %236 = dma.done %s229, 32
        $region44: #{tpu_custom_call.1} parent=31 // pred_fallthru
          _
        %s237 = sand.u32 %s21, 1
        %s238 = scalar_lea.sflag [#allocation3], %s237
        %s239 = sand.u32 %s43, 1
        %s240 = smul.addr %s239, 2
        %s241 = scalar_lea.vmem [#allocation2], %s240
        %p242 = pneg %p56
        %p243 = pneg %p53
        %p244 = pneg %p82
        %p245 = pneg %p79
        %s246 = sand.u32 %s21, 1
        %s247 = scalar_lea.sflag [#allocation3], %s246
        %s248 = sand.u32 %s97, 1
        %s249 = smul.addr %s248, 2
        %s250 = scalar_lea.vmem [#allocation7], %s249
        %p251 = pneg %p110
        %p252 = pneg %p107
        %p253 = pneg %p138
        %p254 = pneg %p135
        %s255 = sand.u32 %s125, 1
        %s256 = scalar_lea.sflag [#allocation4], %s255
        %s257 = sand.u32 %s125, 1
        %s258 = smul.addr %s257, 2
        %s259 = scalar_lea.vmem [#allocation8], %s258
        %v260 = vld [vmem:[%s219] sm:$0x3]
        %v261 = vld [vmem:[#allocation5] sm:$0x3]
        %v262 = vadd.f32 %v260, %v261
        %v263 = vld [vmem:[%s232] sm:$0x3]
        %vm264 = vcmp.ge.s32.totalorder %v263, 2576980378
        %v265 = vmul.f32 %v262, 1.1111112
        %v266 = vsel %vm264, %v265, 0.0
        %267 = vst [vmem:[%s259] sm:$0x3] %v266
        %s268 = sand.u32 %s125, 1
        %s269 = scalar_lea.sflag [#allocation4], %s268
        %s270 = sand.u32 %s125, 1
        %s271 = smul.addr %s270, 2
        %s272 = scalar_lea.vmem [#allocation8], %s271
        // Predicated region
        $region45: #{tpu_custom_call.1} parent=31 // pred_check
          %p273 = pneg %p135
        $region46: #{tpu_custom_call.1} parent=31 // pred_check_branch
          %275 = sbr.rel (%p273) target = $region48
        $region47: #{tpu_custom_call.1} parent=31 // pred_region
          %s277 = ssub.s32 32, 32
          %278 = vsyncadd %s269, %s277
          %s279 = sadd.s32 %s25, %s26
          %s280 = smul.addr %s279, 32
          %s281 = scalar_lea.hbm %s3, %s280
          %s283 = sshll.u32 %s272, 4
          %s284 = int_to_ptr.vmem [resolvable:$true] %s283
          %286 = dma.vmem_to_hbm [thread:$0]  %s284, 32, %s281, %s269
        $region48: #{tpu_custom_call.1} parent=31 // pred_fallthru
          _
      $region32: #{tpu_custom_call.1} parent=5 // pred_fallthru
        _
      %p287 = scmp.le.s32.totalorder 2, %s16
      // Predicated region
      $region49: #{tpu_custom_call.1} parent=5 // pred_check
        %p288 = pneg %p287
      $region50: #{tpu_custom_call.1} parent=5 // pred_check_branch
        %290 = sbr.rel (%p288) target = $region52
      $region51: #{tpu_custom_call.1} parent=5 // pred_region
        %s291 = ssub.s32 %s16, 2
        // Predicated region
        $region53: #{tpu_custom_call.1} parent=51 // pred_check
          %p292 = pneg %p141
        $region54: #{tpu_custom_call.1} parent=51 // pred_check_branch
          %294 = sbr.rel (%p292) target = $region56
        $region55: #{tpu_custom_call.1} parent=51 // pred_region
          %s295 = sand.u32 %s126, 1
          %s296 = scalar_lea.sflag [#allocation4], %s295
          %s297 = sand.u32 %s126, 1
          %s298 = smul.addr %s297, 2
          %s299 = scalar_lea.vmem [#allocation8], %s298
          %300 = dma.done %s296, 32
        $region56: #{tpu_custom_call.1} parent=51 // pred_fallthru
          _
      $region52: #{tpu_custom_call.1} parent=5 // pred_fallthru
        _
    $region6: #{tpu_custom_call.1} parent=1 // loop_footer
      %s20 = sadd.s32 1, %s16
    $region7: #{tpu_custom_call.1} parent=1 // loop_footer_branch
      %15 = sbr.rel target = $region3
    $region8: #{tpu_custom_call.1} parent=1 // loop_exit
      _
    %301 = vsyncpa [#allocation3], 1
    %s302 = scalar_lea.sflag [#allocation3], 1
    %303 = vsyncpa %s302, 1
    %304 = vsyncpa [#allocation6], 1
    %305 = vsyncpa [#allocation4], 1
    %s306 = scalar_lea.sflag [#allocation4], 1
    %307 = vsyncpa %s306, 1

</llo_original>
